<compile_context>
chip_gen: v5e
topology: v5e:2x2
jax: 0.10.0
libtpu: 0.0.40
codegen_flags: <defaults>
</compile_context>

<pallas_src>
import functools

import jax
import jax.numpy as jnp
from jax.experimental import pallas as pl
from jax.experimental.pallas import tpu as pltpu

# ---- "Config" constants (synthetic, consistent with the module) ----
NOISE = 100            # Config.noise (forward hard-codes 100)
NOISE_PAD = 128        # K padded to a full lane tile
HIDDEN = 128           # Config.generator_hidden_layer
BERT_FEATURES = 256    # Config.bert_features
DROPOUT_P = 0.1        # Config.dropout
LEAKY_SLOPE = 0.01     # torch.nn.LeakyReLU default negative_slope


def _round_up(x, m):
    return ((x + m - 1) // m) * m


def _generator_kernel(x_ref, w1_ref, b1_ref, w2_ref, b2_ref, *rest,
                      training: bool):
    """One batch tile: (TB, 128) @ (128, 128) -> leaky-relu -> [mask] -> (TB, 256)."""
    if training:
        mask_ref, out_ref = rest
    else:
        (out_ref,) = rest

    # hidden_layer: bf16 operands, f32 accumulation on the MXU.
    h = jnp.dot(x_ref[...], w1_ref[...],
                preferred_element_type=jnp.float32) + b1_ref[...]

    # LeakyReLU (slope < 1 => max(h, slope*h) is exact): one mul + one max.
    h = jnp.maximum(h, LEAKY_SLOPE * h)

    # Dropout: keep-mask is {0,1}; the 1/(1-p) scale is folded into w2.
    if training:
        h = h * mask_ref[...]

    # output_layer
    y = jnp.dot(h.astype(jnp.bfloat16), w2_ref[...],
                preferred_element_type=jnp.float32) + b2_ref[...]
    out_ref[...] = y.astype(out_ref.dtype)


def generator_forward(noise, w1, b1, w2, b2, *, training=False,
                      dropout_p=DROPOUT_P, dropout_key=None):
    """Generator forward pass in a single batch-tiled Pallas kernel.

    noise: (B, 100) f32;  w1: (100, 128);  b1: (128,)
    w2: (128, 256);       b2: (256,)        -> returns (B, 256) f32
    """
    B, K = noise.shape
    assert K == NOISE and w1.shape == (NOISE, HIDDEN)
    assert w2.shape == (HIDDEN, BERT_FEATURES)

    use_dropout = bool(training) and dropout_p > 0.0

    # Batch tile: 256 rows/step once the batch is big (good MXU height on
    # v6e/v7x, 2x128 passes on v5e); small batches get one padded tile.
    TB = 256 if B >= 256 else _round_up(B, 16)
    B_pad = _round_up(B, TB)

    # Pad K 100->128 and batch B->B_pad; cast MXU operands to bf16.
    x = jnp.pad(noise, ((0, B_pad - B), (0, NOISE_PAD - K))).astype(jnp.bfloat16)
    w1p = jnp.pad(w1, ((0, NOISE_PAD - K), (0, 0))).astype(jnp.bfloat16)
    b1_2d = b1.reshape(1, HIDDEN).astype(jnp.float32)
    w2_eff = w2 * (1.0 / (1.0 - dropout_p)) if use_dropout else w2
    w2b = w2_eff.astype(jnp.bfloat16)
    b2_2d = b2.reshape(1, BERT_FEATURES).astype(jnp.float32)

    grid = (B_pad // TB,)

    in_specs = [
        pl.BlockSpec((TB, NOISE_PAD), lambda i: (i, 0)),          # noise tile
        pl.BlockSpec((NOISE_PAD, HIDDEN), lambda i: (0, 0)),      # w1 (resident)
        pl.BlockSpec((1, HIDDEN), lambda i: (0, 0)),              # b1 (resident)
        pl.BlockSpec((HIDDEN, BERT_FEATURES), lambda i: (0, 0)),  # w2 (resident)
        pl.BlockSpec((1, BERT_FEATURES), lambda i: (0, 0)),       # b2 (resident)
    ]
    operands = [x, w1p, b1_2d, w2b, b2_2d]

    if use_dropout:
        if dropout_key is None:
            dropout_key = jax.random.PRNGKey(0)
        keep = jax.random.bernoulli(dropout_key, 1.0 - dropout_p,
                                    (B_pad, HIDDEN)).astype(jnp.float32)
        in_specs.append(pl.BlockSpec((TB, HIDDEN), lambda i: (i, 0)))
        operands.append(keep)

    kernel = functools.partial(_generator_kernel, training=use_dropout)

    out = pl.pallas_call(
        kernel,
        out_shape=jax.ShapeDtypeStruct((B_pad, BERT_FEATURES), jnp.float32),
        grid=grid,
        in_specs=in_specs,
        out_specs=pl.BlockSpec((TB, BERT_FEATURES), lambda i: (i, 0)),
        compiler_params=pltpu.CompilerParams(
            dimension_semantics=("parallel",)),
    )(*operands)

    return out[:B]


def _init_linear(key, fan_in, fan_out):
    """Deterministic init mimicking torch.nn.Linear: U(-1/sqrt(fan_in), 1/sqrt(fan_in))."""
    kw, kb = jax.random.split(key)
    bound = 1.0 / (fan_in ** 0.5)
    w = jax.random.uniform(kw, (fan_in, fan_out), jnp.float32, -bound, bound)
    b = jax.random.uniform(kb, (fan_out,), jnp.float32, -bound, bound)
    return w, b


if __name__ == "__main__":
    batch_size = 8
    root = jax.random.PRNGKey(0)
    k_noise, k_l1, k_l2, k_drop = jax.random.split(root, 4)

    # torch.normal(zeros, ones) equivalent noise, sampled in JAX.
    # TODO(synk): cannot bit-match torch's RNG stream; statistics are equivalent.
    noise = jax.random.normal(k_noise, (batch_size, NOISE), jnp.float32)

    w1, b1 = _init_linear(k_l1, NOISE, HIDDEN)
    w2, b2 = _init_linear(k_l2, HIDDEN, BERT_FEATURES)

    # Eval-mode forward (dropout is identity) vs. a pure-JAX reference that
    # applies the same bf16 MXU casts.
    out_eval = jax.block_until_ready(
        generator_forward(noise, w1, b1, w2, b2, training=False))

    h_ref = jnp.dot(noise.astype(jnp.bfloat16), w1.astype(jnp.bfloat16),
                    preferred_element_type=jnp.float32) + b1
    h_ref = jnp.maximum(h_ref, LEAKY_SLOPE * h_ref)
    ref = jnp.dot(h_ref.astype(jnp.bfloat16), w2.astype(jnp.bfloat16),
                  preferred_element_type=jnp.float32) + b2
    assert out_eval.shape == (batch_size, BERT_FEATURES)
    assert jnp.allclose(out_eval, ref, atol=1e-2, rtol=1e-2), "mismatch vs reference"

    # Train-mode forward (Bernoulli keep-mask passed in, 1/(1-p) folded into w2).
    out_train = jax.block_until_ready(
        generator_forward(noise, w1, b1, w2, b2, training=True,
                          dropout_key=k_drop))
    assert out_train.shape == (batch_size, BERT_FEATURES)
    assert bool(jnp.all(jnp.isfinite(out_train)))

    print("KERNEL_OK")
</pallas_src>

<mosaic_0001>
module attributes {stable_mosaic.version = 11 : i64} {
  func.func @_generator_kernel(%arg0: i32, %arg1: memref<16x128xbf16, #tpu.memory_space<vmem>>, %arg2: memref<128x128xbf16, #tpu.memory_space<vmem>>, %arg3: memref<1x128xf32, #tpu.memory_space<vmem>>, %arg4: memref<128x256xbf16, #tpu.memory_space<vmem>>, %arg5: memref<1x256xf32, #tpu.memory_space<vmem>>, %arg6: memref<16x256xf32, #tpu.memory_space<vmem>>) attributes {dimension_semantics = [#tpu.dimension_semantics<parallel>], iteration_bounds = array<i64: 1>, scalar_prefetch = 0 : i64, scratch_operands = 0 : i64, tpu.core_type = #tpu.core_type<tc>, window_params = [{transform_indices = @transform_0, window_bounds = array<i64: 16, 128>}, {pipeline_mode = #tpu.pipeline_mode<synchronous>, transform_indices = @transform_1, window_bounds = array<i64: 128, 128>}, {pipeline_mode = #tpu.pipeline_mode<synchronous>, transform_indices = @transform_2, window_bounds = array<i64: 1, 128>}, {pipeline_mode = #tpu.pipeline_mode<synchronous>, transform_indices = @transform_3, window_bounds = array<i64: 128, 256>}, {pipeline_mode = #tpu.pipeline_mode<synchronous>, transform_indices = @transform_4, window_bounds = array<i64: 1, 256>}, {transform_indices = @transform_5, window_bounds = array<i64: 16, 256>}]} {
    %c0 = arith.constant 0 : index
    %c0_0 = arith.constant 0 : index
    %0 = vector.load %arg1[%c0, %c0_0] : memref<16x128xbf16, #tpu.memory_space<vmem>>, vector<16x128xbf16>
    %c0_1 = arith.constant 0 : index
    %c0_2 = arith.constant 0 : index
    %1 = vector.load %arg2[%c0_1, %c0_2] : memref<128x128xbf16, #tpu.memory_space<vmem>>, vector<128x128xbf16>
    %cst = arith.constant dense<0.000000e+00> : vector<16x128xf32>
    %2 = tpu.matmul %0, %1, %cst {dimension_numbers = #tpu.dot_dimension_numbers<[1], [0], [0], [1], [0, 0, 1, 1], [], []>} : vector<16x128xbf16>, vector<128x128xbf16>, vector<16x128xf32> -> vector<16x128xf32>
    %c0_3 = arith.constant 0 : index
    %c0_4 = arith.constant 0 : index
    %3 = vector.load %arg3[%c0_3, %c0_4] : memref<1x128xf32, #tpu.memory_space<vmem>>, vector<1x128xf32>
    %4 = vector.broadcast %3 : vector<1x128xf32> to vector<16x128xf32>
    %5 = arith.addf %2, %4 : vector<16x128xf32>
    %cst_5 = arith.constant 0.00999999977 : f32
    %6 = vector.broadcast %cst_5 : f32 to vector<16x128xf32>
    %7 = arith.mulf %6, %5 : vector<16x128xf32>
    %8 = arith.maximumf %5, %7 : vector<16x128xf32>
    %9 = arith.truncf %8 : vector<16x128xf32> to vector<16x128xbf16>
    %c0_6 = arith.constant 0 : index
    %c0_7 = arith.constant 0 : index
    %10 = vector.load %arg4[%c0_6, %c0_7] : memref<128x256xbf16, #tpu.memory_space<vmem>>, vector<128x256xbf16>
    %cst_8 = arith.constant dense<0.000000e+00> : vector<16x256xf32>
    %11 = tpu.matmul %9, %10, %cst_8 {dimension_numbers = #tpu.dot_dimension_numbers<[1], [0], [0], [1], [0, 0, 1, 1], [], []>} : vector<16x128xbf16>, vector<128x256xbf16>, vector<16x256xf32> -> vector<16x256xf32>
    %c0_9 = arith.constant 0 : index
    %c0_10 = arith.constant 0 : index
    %12 = vector.load %arg5[%c0_9, %c0_10] : memref<1x256xf32, #tpu.memory_space<vmem>>, vector<1x256xf32>
    %13 = vector.broadcast %12 : vector<1x256xf32> to vector<16x256xf32>
    %14 = arith.addf %11, %13 : vector<16x256xf32>
    %c0_11 = arith.constant 0 : index
    %c0_12 = arith.constant 0 : index
    %15 = vector.load %arg6[%c0_11, %c0_12] : memref<16x256xf32, #tpu.memory_space<vmem>>, vector<16x256xf32>
    tpu.vector_store %arg6[%c0_11, %c0_12], %14 {strides = array<i32>} : memref<16x256xf32, #tpu.memory_space<vmem>>, vector<16x256xf32>,
    return
  }
  func.func @transform_0(%arg0: i32) -> (i32, i32) {
    %c0_i32 = arith.constant 0 : i32
    %c0_i32_0 = arith.constant 0 : i32
    return %arg0, %c0_i32 : i32, i32
  }
  func.func @transform_1(%arg0: i32) -> (i32, i32) {
    %c0_i32 = arith.constant 0 : i32
    %c0_i32_0 = arith.constant 0 : i32
    %c0_i32_1 = arith.constant 0 : i32
    return %c0_i32, %c0_i32_0 : i32, i32
  }
  func.func @transform_2(%arg0: i32) -> (i32, i32) {
    %c0_i32 = arith.constant 0 : i32
    %c0_i32_0 = arith.constant 0 : i32
    %c0_i32_1 = arith.constant 0 : i32
    return %c0_i32, %c0_i32_0 : i32, i32
  }
  func.func @transform_3(%arg0: i32) -> (i32, i32) {
    %c0_i32 = arith.constant 0 : i32
    %c0_i32_0 = arith.constant 0 : i32
    %c0_i32_1 = arith.constant 0 : i32
    return %c0_i32, %c0_i32_0 : i32, i32
  }
  func.func @transform_4(%arg0: i32) -> (i32, i32) {
    %c0_i32 = arith.constant 0 : i32
    %c0_i32_0 = arith.constant 0 : i32
    %c0_i32_1 = arith.constant 0 : i32
    return %c0_i32, %c0_i32_0 : i32, i32
  }
  func.func @transform_5(%arg0: i32) -> (i32, i32) {
    %c0_i32 = arith.constant 0 : i32
    %c0_i32_0 = arith.constant 0 : i32
    return %arg0, %c0_i32 : i32, i32
  }
}

</mosaic_0001>

<llo_original>
// kernel: tpu_custom_call.1
$region0: #{tpu_custom_call.1}
  #allocation0 [shape = 'u32[]', space=smem, size = 0x4, offset = 0x4, fixed_abs, tag = 'smem constant byte address 0x4 - core index']
  #allocation1 [shape = 'u32[72,128]{1,0:T(1,128)}', space=vmem, size = 0x9000, scoped, tag = 'internal scratch']
  %s0 = inlined_call_operand.hbm [shape: bf16[16,128], index: 0, kind: input, shape index: {}]
  %s1 = inlined_call_operand.hbm [shape: bf16[128,128], index: 1, kind: input, shape index: {}]
  %s2 = inlined_call_operand.vmem [shape: f32[1,128], index: 2, kind: input, shape index: {}]
  %s3 = inlined_call_operand.hbm [shape: bf16[128,256], index: 3, kind: input, shape index: {}]
  %s4 = inlined_call_operand.vmem [shape: f32[1,256], index: 4, kind: input, shape index: {}]
  %s5 = inlined_call_operand.hbm [shape: f32[16,256], index: 5, kind: output, shape index: {}]
  %s6 = sld [smem:[#allocation0]]
  $region42: #{tpu_custom_call.1} parent=0
    _
  %s8 = ssub.s32 1, %s6
  %s9 = scalar_select 0, %s8, %s6
  $region1: #{tpu_custom_call.1} parent=0
    #allocation2 [shape = 'u8[4096]{0}', space=vmem, size = 0x1000, scoped, tag = 'input window, operand 0, single buffered']
    #allocation3 [shape = 's32[1]{0}', space=sflag, size = 0x4, scoped, tag = 'scoped memory for tpu_custom_call.1']
    #allocation4 [shape = 's32[1]{0}', space=sflag, size = 0x4, scoped, tag = 'scoped memory for tpu_custom_call.1']
    #allocation5 [shape = 'u8[32768]{0}', space=vmem, size = 0x8000, scoped, tag = 'input window, operand 1, single buffered']
    #allocation6 [shape = 's32[1]{0}', space=sflag, size = 0x4, scoped, tag = 'scoped memory for tpu_custom_call.1']
    #allocation7 [shape = 'u8[65536]{0}', space=vmem, size = 0x10000, scoped, tag = 'input window, operand 3, single buffered']
    #allocation8 [shape = 'u8[16384]{0}', space=vmem, size = 0x4000, scoped, tag = 'output window, operand 0, single buffered']
    %10 = vsyncpa [#allocation3], 0
    %11 = vsyncpa [#allocation6], 0
    %12 = vsyncpa [#allocation4], 0
    // Predicated region
    $region2: #{tpu_custom_call.1} parent=1 // pred_check
      _
    $region3: #{tpu_custom_call.1} parent=1 // pred_check_branch
      %14 = sbr.rel (0) target = $region5
    $region4: #{tpu_custom_call.1} parent=1 // pred_region
      %16 = vsyncadd [#allocation3], 0
      %s17 = sshll.u32 %s0, 4
      %s18 = int_to_ptr.hbm [resolvable:$true] %s17
      %s19 = sshll.u32 [#allocation2], 4
      %s20 = int_to_ptr.vmem [resolvable:$true] %s19
      %25 = dma.hbm_to_vmem [thread:$0]  %s18, 128, %s20, [#allocation3], 64, 64, 4
    $region5: #{tpu_custom_call.1} parent=1 // pred_fallthru
      _
    // Predicated region
    $region6: #{tpu_custom_call.1} parent=1 // pred_check
      _
    $region7: #{tpu_custom_call.1} parent=1 // pred_check_branch
      %27 = sbr.rel (0) target = $region9
    $region8: #{tpu_custom_call.1} parent=1 // pred_region
      %29 = vsyncadd [#allocation6], 0
      %s30 = sshll.u32 %s1, 4
      %s31 = int_to_ptr.hbm [resolvable:$true] %s30
      %s32 = sshll.u32 [#allocation5], 4
      %s33 = int_to_ptr.vmem [resolvable:$true] %s32
      %38 = dma.hbm_to_vmem [thread:$0]  %s31, 1024, %s33, [#allocation6], 64, 64, 4
    $region9: #{tpu_custom_call.1} parent=1 // pred_fallthru
      _
    // Predicated region
    $region10: #{tpu_custom_call.1} parent=1 // pred_check
      _
    $region11: #{tpu_custom_call.1} parent=1 // pred_check_branch
      %40 = sbr.rel (0) target = $region13
    $region12: #{tpu_custom_call.1} parent=1 // pred_region
      _
    $region13: #{tpu_custom_call.1} parent=1 // pred_fallthru
      _
    // Predicated region
    $region14: #{tpu_custom_call.1} parent=1 // pred_check
      _
    $region15: #{tpu_custom_call.1} parent=1 // pred_check_branch
      %42 = sbr.rel (0) target = $region17
    $region16: #{tpu_custom_call.1} parent=1 // pred_region
      %44 = vsyncadd [#allocation6], 0
      %s45 = sshll.u32 %s3, 4
      %s46 = int_to_ptr.hbm [resolvable:$true] %s45
      %s47 = sshll.u32 [#allocation7], 4
      %s48 = int_to_ptr.vmem [resolvable:$true] %s47
      %53 = dma.hbm_to_vmem [thread:$0]  %s46, 2048, %s48, [#allocation6], 128, 128, 8
    $region17: #{tpu_custom_call.1} parent=1 // pred_fallthru
      _
    // Predicated region
    $region18: #{tpu_custom_call.1} parent=1 // pred_check
      _
    $region19: #{tpu_custom_call.1} parent=1 // pred_check_branch
      %55 = sbr.rel (0) target = $region21
    $region20: #{tpu_custom_call.1} parent=1 // pred_region
      _
    $region21: #{tpu_custom_call.1} parent=1 // pred_fallthru
      _
    // Predicated region
    $region22: #{tpu_custom_call.1} parent=1 // pred_check
      _
    $region23: #{tpu_custom_call.1} parent=1 // pred_check_branch
      %57 = sbr.rel (0) target = $region25
    $region24: #{tpu_custom_call.1} parent=1 // pred_region
      %59 = dma.done [#allocation3], 128
    $region25: #{tpu_custom_call.1} parent=1 // pred_fallthru
      _
    // Predicated region
    $region26: #{tpu_custom_call.1} parent=1 // pred_check
      _
    $region27: #{tpu_custom_call.1} parent=1 // pred_check_branch
      %61 = sbr.rel (0) target = $region29
    $region28: #{tpu_custom_call.1} parent=1 // pred_region
      %63 = dma.done [#allocation6], 1024
    $region29: #{tpu_custom_call.1} parent=1 // pred_fallthru
      _
    // Predicated region
    $region30: #{tpu_custom_call.1} parent=1 // pred_check
      _
    $region31: #{tpu_custom_call.1} parent=1 // pred_check_branch
      %65 = sbr.rel (0) target = $region33
    $region32: #{tpu_custom_call.1} parent=1 // pred_region
      %67 = dma.done [#allocation6], 2048
    $region33: #{tpu_custom_call.1} parent=1 // pred_fallthru
      _
    %v68 = vld [vmem:[#allocation2] sm:$0xf]
    %v69 = vld [vmem:[#allocation2 + $0x4] sm:$0xf]
    %v70 = vld [vmem:[#allocation5] sm:$0xf]
    %v71 = vld [vmem:[#allocation5 + $0x4] sm:$0xf]
    %v72 = vld [vmem:[#allocation5 + $0x8] sm:$0xf]
    %v73 = vld [vmem:[#allocation5 + $0xc] sm:$0xf]
    %v74 = vld [vmem:[#allocation5 + $0x10] sm:$0xf]
    %v75 = vld [vmem:[#allocation5 + $0x14] sm:$0xf]
    %v76 = vld [vmem:[#allocation5 + $0x18] sm:$0xf]
    %v77 = vld [vmem:[#allocation5 + $0x1c] sm:$0xf]
    %v78 = vld [vmem:[#allocation5 + $0x20] sm:$0xf]
    %v79 = vld [vmem:[#allocation5 + $0x24] sm:$0xf]
    %v80 = vld [vmem:[#allocation5 + $0x28] sm:$0xf]
    %v81 = vld [vmem:[#allocation5 + $0x2c] sm:$0xf]
    %v82 = vld [vmem:[#allocation5 + $0x30] sm:$0xf]
    %v83 = vld [vmem:[#allocation5 + $0x34] sm:$0xf]
    %v84 = vld [vmem:[#allocation5 + $0x38] sm:$0xf]
    %v85 = vld [vmem:[#allocation5 + $0x3c] sm:$0xf]
    %v86 = vld [vmem:[%s2] sm:$0x1]
    %v88 = vperm.slane %v86, 0
    %v92 = vunpack.c.l.b16 %v68
    %v93 = vunpack.c.l.b16 %v69
    %v94 = vpack.c.b16 %v93, %v92
    %v112 = vunpack.c.l.b16 %v70
    %v113 = vunpack.c.l.b16 %v71
    %v114 = vunpack.c.l.b16 %v72
    %v115 = vunpack.c.l.b16 %v73
    %v116 = vunpack.c.l.b16 %v74
    %v117 = vunpack.c.l.b16 %v75
    %v118 = vunpack.c.l.b16 %v76
    %v119 = vunpack.c.l.b16 %v77
    %v120 = vunpack.c.l.b16 %v78
    %v121 = vunpack.c.l.b16 %v79
    %v122 = vunpack.c.l.b16 %v80
    %v123 = vunpack.c.l.b16 %v81
    %v124 = vunpack.c.l.b16 %v82
    %v125 = vunpack.c.l.b16 %v83
    %v126 = vunpack.c.l.b16 %v84
    %v127 = vunpack.c.l.b16 %v85
    %v128 = vpack.c.b16 %v113, %v112
    %v129 = vpack.c.b16 %v115, %v114
    %v130 = vpack.c.b16 %v117, %v116
    %v131 = vpack.c.b16 %v119, %v118
    %v132 = vpack.c.b16 %v121, %v120
    %v133 = vpack.c.b16 %v123, %v122
    %v134 = vpack.c.b16 %v125, %v124
    %v135 = vpack.c.b16 %v127, %v126
    %144 = vmatpush.bf16.msra.mxu0 %v135
    %145 = vmatpush.bf16.msra.mxu0 %v134
    %146 = vmatpush.bf16.msra.mxu0 %v133
    %147 = vmatpush.bf16.msra.mxu0 %v132
    %148 = vmatpush.bf16.msra.mxu0 %v131
    %149 = vmatpush.bf16.msra.mxu0 %v130
    %150 = vmatpush.bf16.msra.mxu0 %v129
    %151 = vmatpush.bf16.msra.mxu0 %v128
    %152 = vmatmul.bf16.gmra.mxu0 %v94
    %v153 = vpop.f32.mrf.mxu0
    %v154 = vadd.f32 %v88, %v153
    %v155 = vpop.f32.mrf.mxu0
    %v156 = vadd.f32 %v88, %v155
    %157 = vdwg.mxu0
    %v158 = vmul.f32 %v154, 0.01
    %v159 = vmul.f32 %v156, 0.01
    %v160 = vmax.f32 %v154, %v158
    %v161 = vmax.f32 %v156, %v159
    %v162 = vpack.c.bf16 %v161, %v160
    %v163 = vld [vmem:[#allocation7] sm:$0xff]
    %v164 = vld [vmem:[#allocation7 + $0x8] sm:$0xff]
    %v165 = vld [vmem:[#allocation7 + $0x10] sm:$0xff]
    %v166 = vld [vmem:[#allocation7 + $0x18] sm:$0xff]
    %v167 = vld [vmem:[#allocation7 + $0x20] sm:$0xff]
    %v168 = vld [vmem:[#allocation7 + $0x28] sm:$0xff]
    %v169 = vld [vmem:[#allocation7 + $0x30] sm:$0xff]
    %v170 = vld [vmem:[#allocation7 + $0x38] sm:$0xff]
    %v171 = vld [vmem:[#allocation7 + $0x40] sm:$0xff]
    %v172 = vld [vmem:[#allocation7 + $0x48] sm:$0xff]
    %v173 = vld [vmem:[#allocation7 + $0x50] sm:$0xff]
    %v174 = vld [vmem:[#allocation7 + $0x58] sm:$0xff]
    %v175 = vld [vmem:[#allocation7 + $0x60] sm:$0xff]
    %v176 = vld [vmem:[#allocation7 + $0x68] sm:$0xff]
    %v177 = vld [vmem:[#allocation7 + $0x70] sm:$0xff]
    %v178 = vld [vmem:[#allocation7 + $0x78] sm:$0xff]
    %v179 = vld [vmem:[%s4] sm:$0x3]
    %v181 = vperm.slane %v179, 0
    %v182 = vperm.slane %v179, 1
    %v201 = vunpack.c.l.b16 %v163
    %v202 = vunpack.c.h.b16 %v163
    %v203 = vunpack.c.l.b16 %v164
    %v204 = vunpack.c.h.b16 %v164
    %v205 = vunpack.c.l.b16 %v165
    %v206 = vunpack.c.h.b16 %v165
    %v207 = vunpack.c.l.b16 %v166
    %v208 = vunpack.c.h.b16 %v166
    %v209 = vunpack.c.l.b16 %v167
    %v210 = vunpack.c.h.b16 %v167
    %v211 = vunpack.c.l.b16 %v168
    %v212 = vunpack.c.h.b16 %v168
    %v213 = vunpack.c.l.b16 %v169
    %v214 = vunpack.c.h.b16 %v169
    %v215 = vunpack.c.l.b16 %v170
    %v216 = vunpack.c.h.b16 %v170
    %v217 = vunpack.c.l.b16 %v171
    %v218 = vunpack.c.h.b16 %v171
    %v219 = vunpack.c.l.b16 %v172
    %v220 = vunpack.c.h.b16 %v172
    %v221 = vunpack.c.l.b16 %v173
    %v222 = vunpack.c.h.b16 %v173
    %v223 = vunpack.c.l.b16 %v174
    %v224 = vunpack.c.h.b16 %v174
    %v225 = vunpack.c.l.b16 %v175
    %v226 = vunpack.c.h.b16 %v175
    %v227 = vunpack.c.l.b16 %v176
    %v228 = vunpack.c.h.b16 %v176
    %v229 = vunpack.c.l.b16 %v177
    %v230 = vunpack.c.h.b16 %v177
    %v231 = vunpack.c.l.b16 %v178
    %v232 = vunpack.c.h.b16 %v178
    %v233 = vpack.c.b16 %v203, %v201
    %v234 = vpack.c.b16 %v204, %v202
    %v235 = vpack.c.b16 %v207, %v205
    %v236 = vpack.c.b16 %v208, %v206
    %v237 = vpack.c.b16 %v211, %v209
    %v238 = vpack.c.b16 %v212, %v210
    %v239 = vpack.c.b16 %v215, %v213
    %v240 = vpack.c.b16 %v216, %v214
    %v241 = vpack.c.b16 %v219, %v217
    %v242 = vpack.c.b16 %v220, %v218
    %v243 = vpack.c.b16 %v223, %v221
    %v244 = vpack.c.b16 %v224, %v222
    %v245 = vpack.c.b16 %v227, %v225
    %v246 = vpack.c.b16 %v228, %v226
    %v247 = vpack.c.b16 %v231, %v229
    %v248 = vpack.c.b16 %v232, %v230
    %265 = vmatpush.bf16.msra.mxu0 %v247
    %266 = vmatpush.bf16.msra.mxu0 %v245
    %267 = vmatpush.bf16.msra.mxu0 %v243
    %268 = vmatpush.bf16.msra.mxu0 %v241
    %269 = vmatpush.bf16.msra.mxu0 %v239
    %270 = vmatpush.bf16.msra.mxu0 %v237
    %271 = vmatpush.bf16.msra.mxu0 %v235
    %272 = vmatpush.bf16.msra.mxu0 %v233
    %273 = vmatmul.bf16.gmra.mxu0 %v162
    %v274 = vpop.f32.mrf.mxu0
    %v275 = vadd.f32 %v181, %v274
    %v276 = vpop.f32.mrf.mxu0
    %v277 = vadd.f32 %v181, %v276
    %278 = vdwg.mxu0
    %279 = vmatpush.bf16.msra.mxu0 %v248
    %280 = vmatpush.bf16.msra.mxu0 %v246
    %281 = vmatpush.bf16.msra.mxu0 %v244
    %282 = vmatpush.bf16.msra.mxu0 %v242
    %283 = vmatpush.bf16.msra.mxu0 %v240
    %284 = vmatpush.bf16.msra.mxu0 %v238
    %285 = vmatpush.bf16.msra.mxu0 %v236
    %286 = vmatpush.bf16.msra.mxu0 %v234
    %287 = vmatmul.bf16.gmra.mxu0 %v162
    %v288 = vpop.f32.mrf.mxu0
    %v289 = vadd.f32 %v182, %v288
    %v290 = vpop.f32.mrf.mxu0
    %v291 = vadd.f32 %v182, %v290
    %292 = vdwg.mxu0
    %293 = vst [vmem:[#allocation8] sm:$0xff] %v275
    %294 = vst [vmem:[#allocation8 + $0x8] sm:$0xff] %v289
    %295 = vst [vmem:[#allocation8 + $0x10] sm:$0xff] %v277
    %296 = vst [vmem:[#allocation8 + $0x18] sm:$0xff] %v291
    // Predicated region
    $region34: #{tpu_custom_call.1} parent=1 // pred_check
      _
    $region35: #{tpu_custom_call.1} parent=1 // pred_check_branch
      %298 = sbr.rel (0) target = $region37
    $region36: #{tpu_custom_call.1} parent=1 // pred_region
      %300 = vsyncadd [#allocation4], 0
      %s301 = sshll.u32 [#allocation8], 4
      %s302 = int_to_ptr.vmem [resolvable:$true] %s301
      %s303 = sshll.u32 %s5, 4
      %s304 = int_to_ptr.hbm [resolvable:$true] %s303
      %309 = dma.vmem_to_hbm [thread:$0]  %s302, 512, %s304, [#allocation4], 256, 256, 16
    $region37: #{tpu_custom_call.1} parent=1 // pred_fallthru
      _
    // Predicated region
    $region38: #{tpu_custom_call.1} parent=1 // pred_check
      _
    $region39: #{tpu_custom_call.1} parent=1 // pred_check_branch
      %311 = sbr.rel (0) target = $region41
    $region40: #{tpu_custom_call.1} parent=1 // pred_region
      %313 = dma.done [#allocation4], 512
    $region41: #{tpu_custom_call.1} parent=1 // pred_fallthru
      _
    %314 = vsyncpa [#allocation3], 1
    %315 = vsyncpa [#allocation6], 1
    %316 = vsyncpa [#allocation4], 1

</llo_original>
